<compile_context>
chip_gen: v5e
topology: v5e:2x2
jax: 0.10.0
libtpu: 0.0.40
codegen_flags: <defaults>
</compile_context>

<pallas_src>
import jax
import jax.numpy as jnp
from jax.experimental import pallas as pl
from jax.experimental.pallas import tpu as pltpu


def _concat_dma_kernel(v0_hbm, v1_hbm, out_hbm, copy_sems):
    """Two strided HBM->HBM DMAs: first half of channels from vol0, second from vol1.

    v0_hbm, v1_hbm : (N, CHW)   refs left in place (pl.ANY)
    out_hbm        : (N, 2*CHW) ref left in place (pl.ANY)
    copy_sems      : (2,) DMA semaphores
    """
    chw = v0_hbm.shape[1]
    cp0 = pltpu.make_async_copy(v0_hbm, out_hbm.at[:, 0:chw], copy_sems.at[0])
    cp1 = pltpu.make_async_copy(v1_hbm, out_hbm.at[:, chw:2 * chw], copy_sems.at[1])
    cp0.start()
    cp1.start()
    cp0.wait()
    cp1.wait()


def concat_channels(vol0: jax.Array, vol1: jax.Array) -> jax.Array:
    """Pallas equivalent of torch.cat([vol0, vol1], dim=1) for NCHW tensors."""
    assert vol0.shape == vol1.shape, "both volumes must share shape"
    assert vol0.dtype == vol1.dtype, "both volumes must share dtype"
    n, c, h, w = vol0.shape
    chw = c * h * w

    # Free, contiguous flatten: per-batch slab view so the DMA sees long
    # contiguous runs (also lane-dense if anything ever stages through VMEM).
    v0 = vol0.reshape(n, chw)
    v1 = vol1.reshape(n, chw)

    out_flat = pl.pallas_call(
        _concat_dma_kernel,
        out_shape=jax.ShapeDtypeStruct((n, 2 * chw), vol0.dtype),
        in_specs=[
            pl.BlockSpec(memory_space=pl.ANY),
            pl.BlockSpec(memory_space=pl.ANY),
        ],
        out_specs=pl.BlockSpec(memory_space=pl.ANY),
        scratch_shapes=[pltpu.SemaphoreType.DMA((2,))],
    )(v0, v1)

    # Row-major reshape back to NCHW: first C channels are vol0, next C are vol1.
    return out_flat.reshape(n, 2 * c, h, w)


class ConcatModule:
    """Mirror of the PyTorch Concat module (stateless, no parameters)."""

    def __init__(self, cfg, volume_channels):
        self.num_out_layers = 2 * volume_channels

    def __call__(self, vol0, vol1):
        return concat_channels(vol0, vol1)


if __name__ == "__main__":
    key = jax.random.PRNGKey(0)
    k0, k1 = jax.random.split(key)

    # Small NCHW shapes: batch=2, channels=4, spatial=16x16
    N, C, H, W = 2, 4, 16, 16
    vol0 = jax.random.normal(k0, (N, C, H, W), dtype=jnp.float32)
    vol1 = jax.random.normal(k1, (N, C, H, W), dtype=jnp.float32)

    module = ConcatModule(cfg=None, volume_channels=C)
    out = module(vol0, vol1)
    out = jax.block_until_ready(out)

    # Reference check (same semantics as torch.cat dim=1).
    ref = jnp.concatenate([vol0, vol1], axis=1)
    assert out.shape == (N, 2 * C, H, W)
    assert out.dtype == vol0.dtype
    assert jnp.array_equal(out, ref)

    print("KERNEL_OK")
</pallas_src>

<mosaic_0001>
module attributes {stable_mosaic.version = 11 : i64} {
  func.func @_concat_dma_kernel(%arg0: memref<2x1024xf32, #tpu.memory_space<any>>, %arg1: memref<2x1024xf32, #tpu.memory_space<any>>, %arg2: memref<2x2048xf32, #tpu.memory_space<any>>, %arg3: memref<2x!tpu.dma_semaphore, #tpu.memory_space<semaphore_mem>>) attributes {dimension_semantics = [], scalar_prefetch = 0 : i64, scratch_operands = 1 : i64, tpu.core_type = #tpu.core_type<tc>} {
    %c0_i32 = arith.constant 0 : i32
    %c0_i32_0 = arith.constant 0 : i32
    %c0_i32_1 = arith.constant 0 : i32
    %0 = tpu.memref_slice %arg2[%c0_i32_0, %c0_i32_1] : memref<2x2048xf32, #tpu.memory_space<any>> -> memref<2x1024xf32, #tpu.memory_space<any>>
    %1 = tpu.memref_slice %arg3[%c0_i32] : memref<2x!tpu.dma_semaphore, #tpu.memory_space<semaphore_mem>> -> memref<1x!tpu.dma_semaphore, #tpu.memory_space<semaphore_mem>>
    %2 = tpu.memref_squeeze %1 : memref<1x!tpu.dma_semaphore, #tpu.memory_space<semaphore_mem>> -> memref<!tpu.dma_semaphore, #tpu.memory_space<semaphore_mem>>
    tpu.enqueue_dma source(%arg0 : memref<2x1024xf32, #tpu.memory_space<any>>) target(%0 : memref<2x1024xf32, #tpu.memory_space<any>>) target_semaphore(%2 : memref<!tpu.dma_semaphore, #tpu.memory_space<semaphore_mem>>)
    %c1_i32 = arith.constant 1 : i32
    %c0_i32_2 = arith.constant 0 : i32
    %c1024_i32 = arith.constant 1024 : i32
    %3 = tpu.memref_slice %arg2[%c0_i32_2, %c1024_i32] : memref<2x2048xf32, #tpu.memory_space<any>> -> memref<2x1024xf32, #tpu.memory_space<any>>
    %4 = tpu.memref_slice %arg3[%c1_i32] : memref<2x!tpu.dma_semaphore, #tpu.memory_space<semaphore_mem>> -> memref<1x!tpu.dma_semaphore, #tpu.memory_space<semaphore_mem>>
    %5 = tpu.memref_squeeze %4 : memref<1x!tpu.dma_semaphore, #tpu.memory_space<semaphore_mem>> -> memref<!tpu.dma_semaphore, #tpu.memory_space<semaphore_mem>>
    tpu.enqueue_dma source(%arg1 : memref<2x1024xf32, #tpu.memory_space<any>>) target(%3 : memref<2x1024xf32, #tpu.memory_space<any>>) target_semaphore(%5 : memref<!tpu.dma_semaphore, #tpu.memory_space<semaphore_mem>>)
    %c0_i32_3 = arith.constant 0 : i32
    %c0_i32_4 = arith.constant 0 : i32
    %c0_i32_5 = arith.constant 0 : i32
    %6 = tpu.memref_slice %arg2[%c0_i32_4, %c0_i32_5] : memref<2x2048xf32, #tpu.memory_space<any>> -> memref<2x1024xf32, #tpu.memory_space<any>>
    %7 = tpu.memref_slice %arg3[%c0_i32_3] : memref<2x!tpu.dma_semaphore, #tpu.memory_space<semaphore_mem>> -> memref<1x!tpu.dma_semaphore, #tpu.memory_space<semaphore_mem>>
    %8 = tpu.memref_squeeze %7 : memref<1x!tpu.dma_semaphore, #tpu.memory_space<semaphore_mem>> -> memref<!tpu.dma_semaphore, #tpu.memory_space<semaphore_mem>>
    tpu.wait_dma2 semaphore(%8 : memref<!tpu.dma_semaphore, #tpu.memory_space<semaphore_mem>>) src(%arg0 : memref<2x1024xf32, #tpu.memory_space<any>>) dst(%6 : memref<2x1024xf32, #tpu.memory_space<any>>)
    %c1_i32_6 = arith.constant 1 : i32
    %c0_i32_7 = arith.constant 0 : i32
    %c1024_i32_8 = arith.constant 1024 : i32
    %9 = tpu.memref_slice %arg2[%c0_i32_7, %c1024_i32_8] : memref<2x2048xf32, #tpu.memory_space<any>> -> memref<2x1024xf32, #tpu.memory_space<any>>
    %10 = tpu.memref_slice %arg3[%c1_i32_6] : memref<2x!tpu.dma_semaphore, #tpu.memory_space<semaphore_mem>> -> memref<1x!tpu.dma_semaphore, #tpu.memory_space<semaphore_mem>>
    %11 = tpu.memref_squeeze %10 : memref<1x!tpu.dma_semaphore, #tpu.memory_space<semaphore_mem>> -> memref<!tpu.dma_semaphore, #tpu.memory_space<semaphore_mem>>
    tpu.wait_dma2 semaphore(%11 : memref<!tpu.dma_semaphore, #tpu.memory_space<semaphore_mem>>) src(%arg1 : memref<2x1024xf32, #tpu.memory_space<any>>) dst(%9 : memref<2x1024xf32, #tpu.memory_space<any>>)
    return
  }
}

</mosaic_0001>

<llo_original>
// kernel: tpu_custom_call.1
$region0: #{tpu_custom_call.1}
  #allocation0 [shape = 'u32[]', space=smem, size = 0x4, offset = 0x4, fixed_abs, tag = 'smem constant byte address 0x4 - core index']
  #allocation1 [shape = 'u32[72,128]{1,0:T(1,128)}', space=vmem, size = 0x9000, scoped, tag = 'internal scratch']
  #allocation2 [shape = 's32[2]{0}', space=sflag, size = 0x8, scoped, tag = 'scratch operand']
  #allocation3 [shape = 's32[]', space=sflag, size = 0x4, offset = 0, fixed_abs, tag = 'sflag constant byte address 0x0 - dummy sync flag']
  #allocation4 [shape = 'u32[0]{0}', space=smem, size = 0, offset = 0, fixed_abs, tag = 'smem constant byte address 0x0 - null']
  #allocation5 [shape = 's32[]', space=sflag, size = 0x4, offset = 0, fixed_abs, tag = 'sflag constant byte address 0x0 - dummy sync flag']
  #allocation6 [shape = 'u32[0]{0}', space=smem, size = 0, offset = 0, fixed_abs, tag = 'smem constant byte address 0x0 - null']
  %s0 = inlined_call_operand.hbm [shape: f32[2,1024], index: 0, kind: input, shape index: {}]
  %s1 = inlined_call_operand.hbm [shape: f32[2,1024], index: 1, kind: input, shape index: {}]
  %s2 = inlined_call_operand.hbm [shape: f32[2,2048], index: 2, kind: output, shape index: {}]
  %s3 = sld [smem:[#allocation0]]
  $region2: #{tpu_custom_call.1} parent=0
    _
  %s5 = ssub.s32 1, %s3
  %s6 = scalar_select 0, %s5, %s3
  %s8 = sshll.u32 1, 14
  %s9 = sxor.u32 4294967295, %s8
  %s11 = sshll.u32 %s0, 4
  %s12 = int_to_ptr.hbm [resolvable:$true] %s11
  %s13 = sshll.u32 %s2, 4
  %s14 = int_to_ptr.hbm [resolvable:$true] %s13
  %17 = dma.general %s12, 256, %s14, [#allocation2], [#allocation3], [#allocation4], 0, 0
  %s18 = scalar_lea.hbm %s2, 16
  %s19 = scalar_lea.sflag [#allocation2], 1
  %s21 = sshll.u32 1, 14
  %s22 = sxor.u32 4294967295, %s21
  %s24 = sshll.u32 %s1, 4
  %s25 = int_to_ptr.hbm [resolvable:$true] %s24
  %s26 = sshll.u32 %s18, 4
  %s27 = int_to_ptr.hbm [resolvable:$true] %s26
  %30 = dma.general %s25, 256, %s27, %s19, [#allocation5], [#allocation6], 0, 0
  %s31 = smul.u32 2, 1
  %s32 = smul.u32 %s31, 8
  %s33 = sshll.u32 %s32, 4
  %34 = dma.done [#allocation2], %s33
  %s35 = sshll.u32 %s32, 4
  %36 = dma.done %s19, %s35
  %37 = vsyncmov [#allocation2]
  %s38 = vpop.sfrf %37
  %p39 = scmp.eq.s32.totalorder %s38, 0
  %p40 = pneg %p39
  %42 = shalt.err (%p40)
  %s43 = scalar_lea.sflag [#allocation2], 1
  %44 = vsyncmov %s43
  %s45 = vpop.sfrf %44
  %p46 = scmp.eq.s32.totalorder %s45, 0
  %p47 = pneg %p46
  %49 = shalt.err (%p47)

</llo_original>
